<compile_context>
chip_gen: v6e
topology: v6e:2x2x1
jax: 0.10.0
libtpu: 0.0.40
codegen_flags: <defaults>
</compile_context>

<pallas_src>
import jax
import jax.numpy as jnp
from jax import lax
from jax.experimental import pallas as pl
from jax.experimental.pallas import tpu as pltpu


def _cdiv(a, b):
    return -(-a // b)


def _round_up(x, m):
    return _cdiv(x, m) * m


def _vmem_capacity_bytes():
    """Physical VMEM per TensorCore; conservative (v7x-like) default on failure."""
    try:
        info = pltpu.get_tpu_info()
        cap = int(getattr(info, "vmem_capacity_bytes", 0) or 0)
        if cap > 0:
            return cap
    except Exception:
        pass
    return 64 << 20


def _make_reduce_matmul_kernel(w_resident):
    """acc (TCO, TM) += W_k (TCO, TK) @ A (TK, TM); store on the last K step."""

    def kernel(a_ref, w_ref, o_ref, acc_ref):
        k = pl.program_id(3)

        @pl.when(k == 0)
        def _init():
            acc_ref[...] = jnp.zeros_like(acc_ref)

        # Resident weight: whole (n_k, C_out, TK) tensor lives in VMEM, pick
        # the current K-slab with a major-dim index (no per-step re-DMA).
        w_blk = w_ref[k] if w_resident else w_ref[...]
        acc_ref[...] += jnp.dot(w_blk, a_ref[...],
                                preferred_element_type=jnp.float32)

        @pl.when(k == pl.num_programs(3) - 1)
        def _finalize():
            o_ref[...] = acc_ref[...].astype(o_ref.dtype)

    return kernel


def conv_for_size_reduce_detached(x, weight, times, *, compute_dtype=None,
                                  tk_cap=None):
    """Forward pass of ConvForSizeReduceDetached.

    x:      (N, C_in, D, H, W)        (NCDHW, as in PyTorch)
    weight: (C_out, C_in, t, t, t)    (Conv3d weight, bias=False)
    compute_dtype: optional streaming dtype (e.g. jnp.bfloat16) for the
        im2col/weight operands; accumulation and output stay float32-accurate
        (f32 MXU accumulator).  Default: keep the input dtype (f32 semantics).
    tk_cap: optional override of the K-tile budget (mainly for testing).
    returns (N, C_out, D//t, H//t, W//t) in x.dtype.
    """
    N, C_in, D, H, W = x.shape
    C_out = weight.shape[0]
    t = int(times)

    # Same validation as the PyTorch module (+ explicit D/H check).
    if C_in != weight.shape[1]:
        raise ValueError("Input data channels is not equal model require")
    if W < t:
        raise ValueError("Input data size is too little")
    if D < t or H < t:
        raise ValueError("Input data size is too little")

    Do, Ho, Wo = D // t, H // t, W // t
    Mn = Do * Ho * Wo               # per-batch number of output voxels
    K = C_in * t * t * t            # patch size (contraction length)

    out_dtype = x.dtype
    cdt = jnp.dtype(x.dtype if compute_dtype is None else compute_dtype)
    itemsize = cdt.itemsize
    out_bytes = jnp.dtype(out_dtype).itemsize
    sub = max(8, 32 // itemsize)    # sublane multiple: 8 (f32) / 16 (bf16)

    # Conv3d with stride == kernel and padding == 0 drops any spatial remainder.
    x = x[:, :, : Do * t, : Ho * t, : Wo * t]

    # im2col in HBM: a[n, k, m], k = (ci, kd, kh, kw), m = (do, ho, wo).
    # Built with the large Do*Ho*Wo axis last so the kernel output
    # (N, C_out, Mn) reshapes to NCDHW for free.
    # TODO(synk): fold this gather into the kernel's input pipeline to remove
    # the extra HBM pass over x; allow_input_fusion below lets XLA try to fuse
    # the producer into the pallas input stream in the meantime.
    xp = x.reshape(N, C_in, Do, t, Ho, t, Wo, t)
    a = jnp.transpose(xp, (0, 1, 3, 5, 7, 2, 4, 6)).reshape(N, K, Mn).astype(cdt)
    wm = weight.reshape(C_out, K).astype(cdt)   # k-ordering matches a's

    # ---------------- chip-aware tile selection -----------------------------
    vmem_cap = _vmem_capacity_bytes()
    big_vmem = vmem_cap >= (100 << 20)          # v5e/v6e (128 MiB) vs v7x (64 MiB)

    # M (lane) tile: large, multiple of 128, at most the last tile ragged.
    tm_cap = 1024 if big_vmem else 512
    TM = Mn if Mn <= tm_cap else tm_cap
    n_m = _cdiv(Mn, TM)

    # C_out tile: bounds weight/acc/output VMEM for large C_out (v7x).
    tco_cap = 256
    TCO = C_out if C_out <= tco_cap else tco_cap
    n_co = _cdiv(C_out, TCO)

    # K (reduction) tile: bounded by a VMEM budget; ragged K handled by
    # zero-padding (exact), never by an unbounded "TK = K" fallback.
    if tk_cap is None:
        tk_cap = 2048 if big_vmem else 1024
    tk_cap = max(int(tk_cap), sub)
    if K <= tk_cap:
        TK, n_k = K, 1
    else:
        n_k = _cdiv(K, tk_cap)
        TK = _round_up(_cdiv(K, n_k), sub)
        n_k = _cdiv(K, TK)
    K_pad = n_k * TK

    # Keep the whole weight resident in VMEM when it is small (and C_out is
    # untiled); otherwise stream (TCO, TK) blocks (lane dim must be 128-aligned
    # when it is not the full K extent).
    w_resident = (n_co == 1) and (C_out * K_pad * itemsize <= (4 << 20))
    if (not w_resident) and n_k > 1 and TK % 128 != 0:
        TK = _round_up(TK, 128)
        n_k = _cdiv(K, TK)
        K_pad = n_k * TK

    if K_pad != K:
        a = jnp.pad(a, ((0, 0), (0, K_pad - K), (0, 0)))
        wm = jnp.pad(wm, ((0, 0), (0, K_pad - K)))

    if w_resident:
        w_arg = wm.reshape(C_out, n_k, TK).transpose(1, 0, 2)   # (n_k, C_out, TK)
        w_spec = pl.BlockSpec((n_k, C_out, TK), lambda n, co, j, k: (0, 0, 0))
        w_blk_bytes = 2 * n_k * C_out * TK * itemsize
    else:
        w_arg = wm                                              # (C_out, K_pad)
        w_spec = pl.BlockSpec((TCO, TK), lambda n, co, j, k: (co, k))
        w_blk_bytes = 2 * TCO * TK * itemsize

    # Streamed im2col input: squeezed batch dim, deeper pipelining on chips
    # with 128 MiB VMEM (the kernel does little compute per tile).
    total_steps = N * n_co * n_m * n_k
    a_buffers = 3 if (big_vmem and total_steps >= 4) else 2
    a_block = (pl.Squeezed(), TK, TM)
    a_map = lambda n, co, j, k: (n, k, j)
    if a_buffers > 2:
        a_spec = pl.BlockSpec(a_block, a_map, pipeline_mode=pl.Buffered(a_buffers))
    else:
        a_spec = pl.BlockSpec(a_block, a_map)

    out_spec = pl.BlockSpec((pl.Squeezed(), TCO, TM),
                            lambda n, co, j, k: (n, co, j))

    # VMEM budget derived from the actual tiles (+ headroom), capped per chip.
    need = (a_buffers * TK * TM * itemsize
            + w_blk_bytes
            + 2 * TCO * TM * out_bytes
            + TCO * TM * 4
            + (2 << 20))
    vmem_limit = int(min(max(need, 32 << 20),
                         (100 << 20) if big_vmem else (48 << 20)))

    cost = pl.CostEstimate(
        flops=2 * N * Mn * K * C_out,
        transcendentals=0,
        bytes_accessed=int(N * K_pad * Mn * itemsize
                           + C_out * K_pad * itemsize
                           + N * C_out * Mn * out_bytes),
    )

    out = pl.pallas_call(
        _make_reduce_matmul_kernel(w_resident),
        out_shape=jax.ShapeDtypeStruct((N, C_out, Mn), out_dtype),
        grid_spec=pltpu.PrefetchScalarGridSpec(
            num_scalar_prefetch=0,
            grid=(N, n_co, n_m, n_k),            # reduction axis last
            in_specs=[a_spec, w_spec],
            out_specs=out_spec,
            scratch_shapes=[pltpu.VMEM((TCO, TM), jnp.float32)],
        ),
        compiler_params=pltpu.CompilerParams(
            dimension_semantics=("parallel", "parallel", "parallel", "arbitrary"),
            vmem_limit_bytes=vmem_limit,
            allow_input_fusion=[True, False],
        ),
        cost_estimate=cost,
    )(a, w_arg)

    # (N, C_out, Do*Ho*Wo) -> (N, C_out, Do, Ho, Wo): free reshape, no transpose.
    return out.reshape(N, C_out, Do, Ho, Wo)


if __name__ == "__main__":
    key = jax.random.PRNGKey(0)
    k1, k2, k3, k4 = jax.random.split(key, 4)

    def ref_conv(xv, wv, tv):
        return lax.conv_general_dilated(
            xv, wv, window_strides=(tv, tv, tv), padding="VALID",
            dimension_numbers=("NCDHW", "OIDHW", "NCDHW"))

    fwd = jax.jit(conv_for_size_reduce_detached, static_argnums=(2,),
                  static_argnames=("compute_dtype", "tk_cap"))

    # -- case 1: base f32 path (batch=2, C_in=4, C_out=8, spatial=8, times=2) --
    N, C_in, C_out, S, t = 2, 4, 8, 8, 2
    x = jax.random.normal(k1, (N, C_in, S, S, S), dtype=jnp.float32)
    w = 0.1 * jax.random.normal(k2, (C_out, C_in, t, t, t), dtype=jnp.float32)
    out = jax.block_until_ready(fwd(x, w, t))
    ref = ref_conv(x, w, t)
    assert out.shape == (N, C_out, S // t, S // t, S // t)
    assert jnp.allclose(out, ref, atol=1e-4, rtol=1e-4), float(
        jnp.max(jnp.abs(out - ref)))

    # -- case 2: bf16-streamed operands, f32 accumulation (looser tolerance) --
    out_bf16 = jax.block_until_ready(fwd(x, w, t, compute_dtype=jnp.bfloat16))
    assert jnp.allclose(out_bf16, ref, atol=3e-2, rtol=3e-2), float(
        jnp.max(jnp.abs(out_bf16 - ref)))

    # -- case 3: forced multi-step K reduction (resident weight slab indexing,
    #            zero-padded ragged K) --
    xk = jax.random.normal(k3, (1, 20, S, S, S), dtype=jnp.float32)
    wk = 0.1 * jax.random.normal(k4, (C_out, 20, t, t, t), dtype=jnp.float32)
    out_k = jax.block_until_ready(fwd(xk, wk, t, tk_cap=64))
    ref_k = ref_conv(xk, wk, t)
    assert jnp.allclose(out_k, ref_k, atol=1e-4, rtol=1e-4), float(
        jnp.max(jnp.abs(out_k - ref_k)))

    # -- case 4: ragged spatial extents (stride==kernel drops the remainder) --
    xr = jax.random.normal(k1, (1, C_in, 7, 10, 9), dtype=jnp.float32)
    out_r = jax.block_until_ready(fwd(xr, w, t))
    ref_r = ref_conv(xr, w, t)
    assert out_r.shape == (1, C_out, 3, 5, 4)
    assert jnp.allclose(out_r, ref_r, atol=1e-4, rtol=1e-4), float(
        jnp.max(jnp.abs(out_r - ref_r)))

    print("KERNEL_OK")
</pallas_src>

<mosaic_0001>
module attributes {stable_mosaic.version = 11 : i64} {
  func.func @kernel(%arg0: i32, %arg1: i32, %arg2: i32, %arg3: i32, %arg4: memref<1x32x64xf32, #tpu.memory_space<vmem>>, %arg5: memref<1x8x32xf32, #tpu.memory_space<vmem>>, %arg6: memref<1x8x64xf32, #tpu.memory_space<vmem>>, %arg7: memref<8x64xf32, #tpu.memory_space<vmem>>) attributes {dimension_semantics = [#tpu.dimension_semantics<parallel>, #tpu.dimension_semantics<parallel>, #tpu.dimension_semantics<parallel>, #tpu.dimension_semantics<arbitrary>], iteration_bounds = array<i64: 2, 1, 1, 1>, scalar_prefetch = 0 : i64, scratch_operands = 1 : i64, tpu.core_type = #tpu.core_type<tc>, window_params = [{transform_indices = @transform_0, window_bounds = array<i64: 1, 32, 64>}, {pipeline_mode = #tpu.pipeline_mode<synchronous>, transform_indices = @transform_1, window_bounds = array<i64: 1, 8, 32>}, {transform_indices = @transform_2, window_bounds = array<i64: 1, 8, 64>}]} {
    %c0_i32 = arith.constant 0 : i32
    %0 = arith.cmpi eq, %arg3, %c0_i32 : i32
    %1 = arith.extui %0 : i1 to i32
    %c0_i32_0 = arith.constant 0 : i32
    %2 = arith.cmpi ne, %1, %c0_i32_0 : i32
    scf.if %2 {
      %cst_11 = arith.constant 0.000000e+00 : f32
      %15 = vector.broadcast %cst_11 : f32 to vector<8x64xf32>
      %c0_12 = arith.constant 0 : index
      %c0_13 = arith.constant 0 : index
      %16 = vector.load %arg7[%c0_12, %c0_13] : memref<8x64xf32, #tpu.memory_space<vmem>>, vector<8x64xf32>
      tpu.vector_store %arg7[%c0_12, %c0_13], %15 {strides = array<i32>} : memref<8x64xf32, #tpu.memory_space<vmem>>, vector<8x64xf32>,
    } else {
    }
    %3 = arith.index_cast %arg3 : i32 to index
    %c0 = arith.constant 0 : index
    %c0_1 = arith.constant 0 : index
    %4 = vector.load %arg5[%3, %c0, %c0_1] : memref<1x8x32xf32, #tpu.memory_space<vmem>>, vector<1x8x32xf32>
    %5 = vector.shape_cast %4 : vector<1x8x32xf32> to vector<8x32xf32>
    %c0_2 = arith.constant 0 : index
    %c0_3 = arith.constant 0 : index
    %6 = vector.load %arg7[%c0_2, %c0_3] : memref<8x64xf32, #tpu.memory_space<vmem>>, vector<8x64xf32>
    %c0_4 = arith.constant 0 : index
    %c0_5 = arith.constant 0 : index
    %c0_6 = arith.constant 0 : index
    %7 = vector.load %arg4[%c0_4, %c0_5, %c0_6] : memref<1x32x64xf32, #tpu.memory_space<vmem>>, vector<1x32x64xf32>
    %8 = vector.shape_cast %7 : vector<1x32x64xf32> to vector<32x64xf32>
    %cst = arith.constant dense<0.000000e+00> : vector<8x64xf32>
    %9 = tpu.matmul %5, %8, %cst {dimension_numbers = #tpu.dot_dimension_numbers<[1], [0], [0], [1], [0, 0, 1, 1], [], []>} : vector<8x32xf32>, vector<32x64xf32>, vector<8x64xf32> -> vector<8x64xf32>
    %10 = arith.addf %6, %9 : vector<8x64xf32>
    %c0_7 = arith.constant 0 : index
    %c0_8 = arith.constant 0 : index
    %11 = vector.load %arg7[%c0_7, %c0_8] : memref<8x64xf32, #tpu.memory_space<vmem>>, vector<8x64xf32>
    tpu.vector_store %arg7[%c0_7, %c0_8], %10 {strides = array<i32>} : memref<8x64xf32, #tpu.memory_space<vmem>>, vector<8x64xf32>,
    %c0_i32_9 = arith.constant 0 : i32
    %12 = arith.cmpi eq, %arg3, %c0_i32_9 : i32
    %13 = arith.extui %12 : i1 to i32
    %c0_i32_10 = arith.constant 0 : i32
    %14 = arith.cmpi ne, %13, %c0_i32_10 : i32
    scf.if %14 {
      %c0_11 = arith.constant 0 : index
      %c0_12 = arith.constant 0 : index
      %15 = vector.load %arg7[%c0_11, %c0_12] : memref<8x64xf32, #tpu.memory_space<vmem>>, vector<8x64xf32>
      %c0_13 = arith.constant 0 : index
      %c0_14 = arith.constant 0 : index
      %c0_15 = arith.constant 0 : index
      %16 = vector.load %arg6[%c0_13, %c0_14, %c0_15] : memref<1x8x64xf32, #tpu.memory_space<vmem>>, vector<1x8x64xf32>
      %17 = vector.shape_cast %16 : vector<1x8x64xf32> to vector<8x64xf32>
      %18 = vector.shape_cast %15 : vector<8x64xf32> to vector<1x8x64xf32>
      tpu.vector_store %arg6[%c0_13, %c0_14, %c0_15], %18 {strides = array<i32>} : memref<1x8x64xf32, #tpu.memory_space<vmem>>, vector<1x8x64xf32>,
    } else {
    }
    return
  }
  func.func @transform_0(%arg0: i32, %arg1: i32, %arg2: i32, %arg3: i32) -> (i32, i32, i32) {
    %c0_i32 = arith.constant 0 : i32
    return %arg0, %arg3, %arg2 : i32, i32, i32
  }
  func.func @transform_1(%arg0: i32, %arg1: i32, %arg2: i32, %arg3: i32) -> (i32, i32, i32) {
    %c0_i32 = arith.constant 0 : i32
    %c0_i32_0 = arith.constant 0 : i32
    %c0_i32_1 = arith.constant 0 : i32
    %c0_i32_2 = arith.constant 0 : i32
    return %c0_i32, %c0_i32_0, %c0_i32_1 : i32, i32, i32
  }
  func.func @transform_2(%arg0: i32, %arg1: i32, %arg2: i32, %arg3: i32) -> (i32, i32, i32) {
    %c0_i32 = arith.constant 0 : i32
    return %arg0, %arg1, %arg2 : i32, i32, i32
  }
}

</mosaic_0001>

<llo_original>
// kernel: conv_for_size_reduce_detached.1
$region0: #{conv_for_size_reduce_detached.1}
  #allocation0 [shape = 'u32[]', space=smem, size = 0x4, offset = 0x4, fixed_abs, tag = 'smem constant byte address 0x4 - core index']
  #allocation1 [shape = 'u32[144,128]{1,0:T(1,128)}', space=vmem, size = 0x12000, scoped, tag = 'internal scratch']
  #allocation2 [shape = 'f32[8,64]{1,0:T(8,128)}', space=vmem, size = 0x1000, scoped, tag = 'scratch operand']
  %s0 = inlined_call_operand.vmem [shape: f32[2,32,64], index: 0, kind: input, shape index: {}]
  %s1 = inlined_call_operand.vmem [shape: f32[1,8,32], index: 1, kind: input, shape index: {}]
  %s2 = inlined_call_operand.vmem [shape: f32[2,8,64], index: 2, kind: output, shape index: {}]
  %s3 = sld [smem:[#allocation0]]
  $region49: #{conv_for_size_reduce_detached.1} parent=0
    _
  %s5 = ssub.s32 1, %s3
  %s6 = scalar_select 0, %s5, %s3
  loop: start=0, step=1, limit=4
  $region2: #{conv_for_size_reduce_detached.1} parent=0 // loop_pre_header
    _
  $region3: #{conv_for_size_reduce_detached.1} parent=0 // loop_header
    %s8 = sphi 0, %s12
    %p9 = scmp.ge.s32.totalorder %s8, 4
    %s15 = sphi 0, %s41
    %s16 = sphi 0, %s37
    %s17 = sphi 0, %s33
    %s18 = sphi 0, %s29
    %s19 = sphi 0, %s15
    %s20 = sphi 0, %s16
    %s21 = sphi 0, %s17
    %s22 = sphi 0, %s18
    %s23 = sphi 0, %s19
    %s24 = sphi 0, %s20
    %s25 = sphi 0, %s21
    %s26 = sphi 0, %s22
    %s48 = sphi 0, %s50
    %s51 = sphi 0, %s48
    %s52 = sphi 0, %s51
    %s68 = sphi 0, %s52
    %s72 = sphi 0, %s72
    %s74 = sphi 0, %s72
    %s75 = sphi 0, %s74
    %s89 = sphi 0, %s75
    %s99 = sphi 0, %s101
    %s102 = sphi 0, %s99
    %s103 = sphi 0, %s102
    %s119 = sphi 0, %s103
  $region4: #{conv_for_size_reduce_detached.1} parent=0 // loop_header_branch
    %11 = sbr.rel (%p9) target = $region8
  $region5: #{conv_for_size_reduce_detached.1} parent=0 // loop_body
    %s13 = ssub.s32 %s8, 1
    %s14 = ssub.s32 %s8, 2
    %s27 = sadd.s32 1, %s18
    %p28 = scmp.ge.s32.totalorder %s27, 1
    %s29 = scalar_select %p28, 0, %s27
    %s30 = sadd.s32 1, %s17
    %s31 = scalar_select %p28, %s30, %s17
    %p32 = scmp.ge.s32.totalorder %s31, 1
    %s33 = scalar_select %p32, 0, %s31
    %s34 = sadd.s32 1, %s16
    %s35 = scalar_select %p32, %s34, %s16
    %p36 = scmp.ge.s32.totalorder %s35, 1
    %s37 = scalar_select %p36, 0, %s35
    %s38 = sadd.s32 1, %s15
    %s39 = scalar_select %p36, %s38, %s15
    %p40 = scmp.ge.s32.totalorder %s39, 2
    %s41 = scalar_select %p40, 0, %s39
    %s42 = ssub.s32 %s15, %s41
    %s43 = ssub.s32 %s18, %s29
    %s44 = sor.u32 %s42, %s43
    %s45 = ssub.s32 %s17, %s33
    %s46 = sor.u32 %s44, %s45
    %p47 = scmp.eq.s32.totalorder %s46, 0
    %s49 = sadd.s32 %s48, 1
    %s50 = scalar_select %p47, %s48, %s49
    %p53 = pneg %p47
    %p54 = scmp.eq.s32.totalorder %s8, 1
    %p55 = por %p53, %p54
    %p56 = scmp.ne.s32.totalorder %s48, %s51
    %p57 = scmp.eq.s32.totalorder %s8, 0
    %p58 = por %p56, %p57
    %p59 = scmp.ne.s32.totalorder %s48, %s51
    %p60 = scmp.eq.s32.totalorder %s13, 1
    %p61 = por %p59, %p60
    %p62 = scmp.ne.s32.totalorder %s51, %s52
    %p63 = scmp.eq.s32.totalorder %s13, 0
    %p64 = por %p62, %p63
    %p65 = scmp.ne.s32.totalorder %s51, %s52
    %p66 = scmp.eq.s32.totalorder %s14, 1
    %p67 = por %p65, %p66
    %p69 = scmp.ne.s32.totalorder %s52, %s68
    %p70 = scmp.eq.s32.totalorder %s14, 0
    %p71 = por %p69, %p70
    %s73 = sadd.s32 %s72, 1
    %p76 = scmp.eq.s32.totalorder %s8, 1
    %p77 = scmp.ne.s32.totalorder %s72, %s74
    %p78 = scmp.eq.s32.totalorder %s8, 0
    %p79 = por %p77, %p78
    %p80 = scmp.ne.s32.totalorder %s72, %s74
    %p81 = scmp.eq.s32.totalorder %s13, 1
    %p82 = por %p80, %p81
    %p83 = scmp.ne.s32.totalorder %s74, %s75
    %p84 = scmp.eq.s32.totalorder %s13, 0
    %p85 = por %p83, %p84
    %p86 = scmp.ne.s32.totalorder %s74, %s75
    %p87 = scmp.eq.s32.totalorder %s14, 1
    %p88 = por %p86, %p87
    %p90 = scmp.ne.s32.totalorder %s75, %s89
    %p91 = scmp.eq.s32.totalorder %s14, 0
    %p92 = por %p90, %p91
    %s93 = ssub.s32 %s15, %s41
    %s94 = ssub.s32 %s16, %s37
    %s95 = sor.u32 %s93, %s94
    %s96 = ssub.s32 %s17, %s33
    %s97 = sor.u32 %s95, %s96
    %p98 = scmp.eq.s32.totalorder %s97, 0
    %s100 = sadd.s32 %s99, 1
    %s101 = scalar_select %p98, %s99, %s100
    %p104 = pneg %p98
    %p105 = scmp.eq.s32.totalorder %s8, 1
    %p106 = por %p104, %p105
    %p107 = scmp.ne.s32.totalorder %s99, %s102
    %p108 = scmp.eq.s32.totalorder %s8, 0
    %p109 = por %p107, %p108
    %p110 = scmp.ne.s32.totalorder %s99, %s102
    %p111 = scmp.eq.s32.totalorder %s13, 1
    %p112 = por %p110, %p111
    %p113 = scmp.ne.s32.totalorder %s102, %s103
    %p114 = scmp.eq.s32.totalorder %s13, 0
    %p115 = por %p113, %p114
    %p116 = scmp.ne.s32.totalorder %s102, %s103
    %p117 = scmp.eq.s32.totalorder %s14, 1
    %p118 = por %p116, %p117
    %p120 = scmp.ne.s32.totalorder %s103, %s119
    %p121 = scmp.eq.s32.totalorder %s14, 0
    %p122 = por %p120, %p121
    %p123 = scmp.le.s32.totalorder 1, %s8
    %p124 = scmp.lt.s32.totalorder %s8, 3
    %p125 = pnand %p123, %p124
    %p126 = pneg %p125
    // Predicated region
    $region9: #{conv_for_size_reduce_detached.1} parent=5 // pred_check
      _
    $region10: #{conv_for_size_reduce_detached.1} parent=5 // pred_check_branch
      %128 = sbr.rel (%p125) target = $region12
    $region11: #{conv_for_size_reduce_detached.1} parent=5 // pred_region
      %s129 = ssub.s32 %s8, 1
      // Predicated region
      $region13: #{conv_for_size_reduce_detached.1} parent=11 // pred_check
        %p130 = pneg %p85
      $region14: #{conv_for_size_reduce_detached.1} parent=11 // pred_check_branch
        %132 = sbr.rel (%p130) target = $region16
      $region15: #{conv_for_size_reduce_detached.1} parent=11 // pred_region
        _
      $region16: #{conv_for_size_reduce_detached.1} parent=11 // pred_fallthru
        _
    $region12: #{conv_for_size_reduce_detached.1} parent=5 // pred_fallthru
      _
    %p133 = scmp.lt.s32.totalorder %s8, 2
    // Predicated region
    $region17: #{conv_for_size_reduce_detached.1} parent=5 // pred_check
      %p134 = pneg %p133
    $region18: #{conv_for_size_reduce_detached.1} parent=5 // pred_check_branch
      %136 = sbr.rel (%p134) target = $region20
    $region19: #{conv_for_size_reduce_detached.1} parent=5 // pred_region
      // Predicated region
      $region21: #{conv_for_size_reduce_detached.1} parent=19 // pred_check
        %p137 = pneg %p58
      $region22: #{conv_for_size_reduce_detached.1} parent=19 // pred_check_branch
        %139 = sbr.rel (%p137) target = $region24
      $region23: #{conv_for_size_reduce_detached.1} parent=19 // pred_region
        %s140 = smul.u32 4, %s18
        %p141 = scmp.lt.s32.totalorder %s15, 1
        %s142 = scalar_select %p141, %s15, 1
        %p143 = scmp.lt.s32.totalorder %s140, 3
        %s144 = scalar_select %p143, %s140, 3
        %p145 = scmp.lt.s32.totalorder %s17, 0
        %s146 = scalar_select %p145, %s17, 0
        %s147 = sadd.s32 %s146, %s144
        %s148 = smul.addr %s142, 4
        %s149 = sadd.s32 %s147, %s148
        %s150 = smul.addr %s149, 8
        %s151 = scalar_lea.vmem %s0, %s150
        %s152 = smul.u32 4, %s18
      $region24: #{conv_for_size_reduce_detached.1} parent=19 // pred_fallthru
        _
    $region20: #{conv_for_size_reduce_detached.1} parent=5 // pred_fallthru
      _
    %p153 = scmp.le.s32.totalorder 1, %s8
    %p154 = scmp.lt.s32.totalorder %s8, 3
    %p155 = pnand %p153, %p154
    %p156 = pneg %p155
    // Predicated region
    $region25: #{conv_for_size_reduce_detached.1} parent=5 // pred_check
      _
    $region26: #{conv_for_size_reduce_detached.1} parent=5 // pred_check_branch
      %158 = sbr.rel (%p155) target = $region28
    $region27: #{conv_for_size_reduce_detached.1} parent=5 // pred_region
      %s159 = ssub.s32 %s8, 1
      %s160 = smul.u32 4, %s22
      %p161 = scmp.lt.s32.totalorder %s19, 1
      %s162 = scalar_select %p161, %s19, 1
      %p163 = scmp.lt.s32.totalorder %s160, 3
      %s164 = scalar_select %p163, %s160, 3
      %p165 = scmp.lt.s32.totalorder %s21, 0
      %s166 = scalar_select %p165, %s21, 0
      %s167 = sadd.s32 %s166, %s164
      %s168 = smul.addr %s162, 4
      %s169 = sadd.s32 %s167, %s168
      %s170 = smul.addr %s169, 8
      %s171 = scalar_lea.vmem %s0, %s170
      %p172 = pneg %p64
      %p173 = pneg %p61
      %p174 = pneg %p85
      %p175 = pneg %p82
      %p176 = pneg %p115
      %p177 = pneg %p112
      %p178 = scmp.lt.s32.totalorder %s19, 1
      %s179 = scalar_select %p178, %s19, 1
      %p180 = scmp.lt.s32.totalorder %s20, 0
      %s181 = scalar_select %p180, %s20, 0
      %p182 = scmp.lt.s32.totalorder %s21, 0
      %s183 = scalar_select %p182, %s21, 0
      %s184 = sadd.s32 %s183, %s181
      %s185 = sadd.s32 %s184, %s179
      %s186 = smul.addr %s185, 8
      %s187 = scalar_lea.vmem %s2, %s186
      %s188 = smul.u32 4, %s22
      %p189 = scmp.lt.s32.totalorder %s19, 1
      %s190 = scalar_select %p189, %s19, 1
      %p191 = scmp.lt.s32.totalorder %s188, 3
      %s192 = scalar_select %p191, %s188, 3
      %p193 = scmp.lt.s32.totalorder %s21, 0
      %s194 = scalar_select %p193, %s21, 0
      %s195 = sadd.s32 %s194, %s192
      %s196 = smul.addr %s190, 4
      %s197 = sadd.s32 %s195, %s196
      %s198 = smul.addr %s197, 8
      %s199 = scalar_lea.vmem %s0, %s198
      %s200 = smul.u32 4, %s22
      %p201 = scmp.lt.s32.totalorder %s19, 1
      %s202 = scalar_select %p201, %s19, 1
      %p203 = scmp.lt.s32.totalorder %s20, 0
      %s204 = scalar_select %p203, %s20, 0
      %p205 = scmp.lt.s32.totalorder %s21, 0
      %s206 = scalar_select %p205, %s21, 0
      %s207 = sadd.s32 %s206, %s204
      %s208 = sadd.s32 %s207, %s202
      %s209 = smul.addr %s208, 8
      %s210 = scalar_lea.vmem %s2, %s209
      %p211 = scmp.eq.s32.totalorder %s22, 0
      // Predicated region
      $region29: #{conv_for_size_reduce_detached.1} parent=27 // pred_check
        %p212 = pneg %p211
      $region30: #{conv_for_size_reduce_detached.1} parent=27 // pred_check_branch
        %214 = sbr.rel (%p212) target = $region32
      $region31: #{conv_for_size_reduce_detached.1} parent=27 // pred_region
        %vm215 = vcmask 523264
        %216 = vst.msk [vmem:[#allocation2] sm:$0xff] %vm215, 0.0
      $region32: #{conv_for_size_reduce_detached.1} parent=27 // pred_fallthru
        _
      %s217 = smul.u32 %s22, 8
      %s218 = scalar_lea.vmem %s1, %s217
      %v219 = vld [vmem:[%s218] sm:$0xff]
      %v220 = vld [vmem:[#allocation2] sm:$0xff]
      %v221 = vld [vmem:[%s199] sm:$0xff]
      %v222 = vld [vmem:[%s199 + $0x8] sm:$0xff]
      %v223 = vld [vmem:[%s199 + $0x10] sm:$0xff]
      %v224 = vld [vmem:[%s199 + $0x18] sm:$0xff]
      %vm225 = vcmask 261120
      %v227 = vsel %vm225, %v219, 0
      %229 = vmatprep.subr.mxu0 0.0
      %230 = vmatpush1.msra.mxu0 0.0
      %231 = vmatprep.subr.mxu0 0.0
      %232 = vmatpush1.msra.mxu0 0.0
      %233 = vmatprep.subr.mxu0 0.0
      %234 = vmatpush1.msra.mxu0 0.0
      %235 = vmatprep.subr.mxu0 0.0
      %236 = vmatpush1.msra.mxu0 0.0
      %237 = vmatprep.subr.mxu0 0.0
      %238 = vmatpush1.msra.mxu0 0.0
      %239 = vmatprep.subr.mxu0 0.0
      %240 = vmatpush1.msra.mxu0 0.0
      %241 = vmatprep.subr.mxu0 0.0
      %242 = vmatpush1.msra.mxu0 0.0
      %243 = vmatprep.subr.mxu0 0.0
      %244 = vmatpush1.msra.mxu0 0.0
      %245 = vmatprep.subr.mxu0 0.0
      %246 = vmatpush1.msra.mxu0 0.0
      %247 = vmatprep.subr.mxu0 0.0
      %248 = vmatpush1.msra.mxu0 0.0
      %249 = vmatprep.subr.mxu0 0.0
      %250 = vmatpush1.msra.mxu0 0.0
      %251 = vmatprep.subr.mxu0 0.0
      %252 = vmatpush1.msra.mxu0 0.0
      %253 = vmatprep.subr.mxu0 0.0
      %254 = vmatpush1.msra.mxu0 %v224
      %255 = vmatprep.subr.mxu0 0.0
      %256 = vmatpush1.msra.mxu0 %v223
      %257 = vmatprep.subr.mxu0 0.0
      %258 = vmatpush1.msra.mxu0 %v222
      %259 = vmatprep.subr.mxu0 0.0
      %260 = vmatpush1.msra.mxu0 %v221
      %261 = vmatprep.subr.mxu0 0.0
      %262 = vmatpush2.msra.mxu0 0.0
      %263 = vmatprep.subr.mxu0 0.0
      %264 = vmatpush2.msra.mxu0 0.0
      %265 = vmatprep.subr.mxu0 0.0
      %266 = vmatpush2.msra.mxu0 0.0
      %267 = vmatprep.subr.mxu0 0.0
      %268 = vmatpush2.msra.mxu0 0.0
      %269 = vmatprep.subr.mxu0 0.0
      %270 = vmatpush2.msra.mxu0 0.0
      %271 = vmatprep.subr.mxu0 0.0
      %272 = vmatpush2.msra.mxu0 0.0
      %273 = vmatprep.subr.mxu0 0.0
      %274 = vmatpush2.msra.mxu0 0.0
      %275 = vmatprep.subr.mxu0 0.0
      %276 = vmatpush2.msra.mxu0 0.0
      %277 = vmatprep.subr.mxu0 0.0
      %278 = vmatpush2.msra.mxu0 0.0
      %279 = vmatprep.subr.mxu0 0.0
      %280 = vmatpush2.msra.mxu0 0.0
      %281 = vmatprep.subr.mxu0 0.0
      %282 = vmatpush2.msra.mxu0 0.0
      %283 = vmatprep.subr.mxu0 0.0
      %284 = vmatpush2.msra.mxu0 0.0
      %285 = vmatprep.subr.mxu0 0.0
      %286 = vmatpush2.msra.mxu0 0.0
      %287 = vmatprep.subr.mxu0 0.0
      %288 = vmatpush2.msra.mxu0 0.0
      %289 = vmatprep.subr.mxu0 0.0
      %290 = vmatpush2.msra.mxu0 0.0
      %291 = vmatprep.subr.mxu0 0.0
      %292 = vmatpush2.msra.mxu0 0.0
      %293 = vmatprep.mubr.f32.mxu0 0.0
      %294 = vmatmul.mubr.f32.gmra.mxu0 %v227
      %v295 = vpop.f32.mrf.mxu0
      %v296 = vadd.f32 0.0, %v295
      %v297 = vpop.f32.mrf.mxu0
      %298 = vdwg.mxu0
      %v299 = vadd.f32 %v220, %v296
      %vm300 = vcmask 523264
      %301 = vst.msk [vmem:[#allocation2] sm:$0xff] %vm300, %v299
      // Predicated region
      $region33: #{conv_for_size_reduce_detached.1} parent=27 // pred_check
        %p302 = pneg %p211
      $region34: #{conv_for_size_reduce_detached.1} parent=27 // pred_check_branch
        %304 = sbr.rel (%p302) target = $region36
      $region35: #{conv_for_size_reduce_detached.1} parent=27 // pred_region
        %v305 = vld [vmem:[#allocation2] sm:$0xff]
        %306 = vst.msk [vmem:[%s210] sm:$0xff] %vm300, %v305
      $region36: #{conv_for_size_reduce_detached.1} parent=27 // pred_fallthru
        _
      %p307 = scmp.lt.s32.totalorder %s19, 1
      %s308 = scalar_select %p307, %s19, 1
      %p309 = scmp.lt.s32.totalorder %s20, 0
      %s310 = scalar_select %p309, %s20, 0
      %p311 = scmp.lt.s32.totalorder %s21, 0
      %s312 = scalar_select %p311, %s21, 0
      %s313 = sadd.s32 %s312, %s310
      %s314 = sadd.s32 %s313, %s308
      %s315 = smul.addr %s314, 8
      %s316 = scalar_lea.vmem %s2, %s315
      // Predicated region
      $region37: #{conv_for_size_reduce_detached.1} parent=27 // pred_check
        %p317 = pneg %p112
      $region38: #{conv_for_size_reduce_detached.1} parent=27 // pred_check_branch
        %319 = sbr.rel (%p317) target = $region40
      $region39: #{conv_for_size_reduce_detached.1} parent=27 // pred_region
        _
      $region40: #{conv_for_size_reduce_detached.1} parent=27 // pred_fallthru
        _
    $region28: #{conv_for_size_reduce_detached.1} parent=5 // pred_fallthru
      _
    %p320 = scmp.le.s32.totalorder 2, %s8
    // Predicated region
    $region41: #{conv_for_size_reduce_detached.1} parent=5 // pred_check
      %p321 = pneg %p320
    $region42: #{conv_for_size_reduce_detached.1} parent=5 // pred_check_branch
      %323 = sbr.rel (%p321) target = $region44
    $region43: #{conv_for_size_reduce_detached.1} parent=5 // pred_region
      %s324 = ssub.s32 %s8, 2
      // Predicated region
      $region45: #{conv_for_size_reduce_detached.1} parent=43 // pred_check
        %p325 = pneg %p118
      $region46: #{conv_for_size_reduce_detached.1} parent=43 // pred_check_branch
        %327 = sbr.rel (%p325) target = $region48
      $region47: #{conv_for_size_reduce_detached.1} parent=43 // pred_region
        %p328 = scmp.lt.s32.totalorder %s23, 1
        %s329 = scalar_select %p328, %s23, 1
        %p330 = scmp.lt.s32.totalorder %s24, 0
        %s331 = scalar_select %p330, %s24, 0
        %p332 = scmp.lt.s32.totalorder %s25, 0
        %s333 = scalar_select %p332, %s25, 0
        %s334 = sadd.s32 %s333, %s331
        %s335 = sadd.s32 %s334, %s329
        %s336 = smul.addr %s335, 8
        %s337 = scalar_lea.vmem %s2, %s336
      $region48: #{conv_for_size_reduce_detached.1} parent=43 // pred_fallthru
        _
    $region44: #{conv_for_size_reduce_detached.1} parent=5 // pred_fallthru
      _
  $region6: #{conv_for_size_reduce_detached.1} parent=0 // loop_footer
    %s12 = sadd.s32 1, %s8
  $region7: #{conv_for_size_reduce_detached.1} parent=0 // loop_footer_branch
    %7 = sbr.rel target = $region3
  $region8: #{conv_for_size_reduce_detached.1} parent=0 // loop_exit
    _

</llo_original>
